<compile_context>
chip_gen: v7x
topology: tpu7x:2x2x1
jax: 0.10.0
libtpu: 0.0.40
codegen_flags: <defaults>
</compile_context>

<pallas_src>
import jax
import jax.numpy as jnp
from jax import lax
from jax.experimental import pallas as pl
from jax.experimental.pallas import tpu as pltpu


def _round_up(x: int, m: int) -> int:
    return ((x + m - 1) // m) * m


def _cond_gen_kernel(ids_ref,       # VMEM (TB, 1)        int32  per-row class ids
                     noise_ref,     # VMEM (TB, LC)       bf16
                     w_noise_ref,   # VMEM (LC, TN)       bf16
                     cond_tbl_ref,  # VMEM (NCLS_PAD, TN) f32    fused per-class bias
                     out_ref):      # VMEM (TB, TN)       bf16
    # Single hot-path MXU matmul: bf16 operands, f32 accumulation.
    acc = jnp.dot(noise_ref[...], w_noise_ref[...],
                  preferred_element_type=jnp.float32)

    # Vectorized class gather as a one-hot matmul on the (otherwise idle) MXU.
    # Exactly one nonzero per row -> numerically identical to a row select.
    tb = ids_ref.shape[0]
    ncls = cond_tbl_ref.shape[0]
    onehot = (ids_ref[...] ==
              lax.broadcasted_iota(jnp.int32, (tb, ncls), 1)).astype(jnp.float32)
    bias = jnp.dot(onehot, cond_tbl_ref[...],
                   preferred_element_type=jnp.float32)

    out_ref[...] = jnp.tanh(acc + bias).astype(out_ref.dtype)


class ConditionalGenerator:
    """JAX/Pallas port of synthcity's ConditionalGenerator (conditional path)."""

    def __init__(self, n_channels: int, n_units_latent: int, cond: jnp.ndarray,
                 cond_embedding_n_units_hidden: int = 32, image_size: int = 8,
                 key: jax.Array = None):
        self.n_channels = n_channels
        self.n_units_latent = n_units_latent
        self.image_size = image_size
        self.cond = cond

        # NOTE: requires a concrete `cond` at construction time (same as torch).
        classes = jnp.unique(cond)
        n_classes = int(classes.shape[0])
        self.n_classes = n_classes
        self.n_classes_pad = _round_up(n_classes, 8)
        H = cond_embedding_n_units_hidden
        C, L, S = n_channels, n_units_latent, image_size

        if key is None:
            key = jax.random.PRNGKey(0)
        k_emb, k_lw, k_lb, k_mw, k_mb = jax.random.split(key, 5)

        # nn.Embedding(n_classes, H): N(0, 1) init
        self.emb_table = jax.random.normal(k_emb, (n_classes, H), jnp.float32)
        # nn.Linear(H, C*L): U(-1/sqrt(H), 1/sqrt(H))
        bnd = 1.0 / jnp.sqrt(jnp.float32(H))
        self.lin_w = jax.random.uniform(k_lw, (H, C * L), jnp.float32, -bnd, bnd)
        self.lin_b = jax.random.uniform(k_lb, (1, C * L), jnp.float32, -bnd, bnd)

        # core "model": Linear(L*2C -> C*S*S) + tanh
        in_dim = L * 2 * C
        out_dim = C * S * S
        self.out_dim = out_dim
        mbnd = 1.0 / jnp.sqrt(jnp.float32(in_dim))
        model_w = jax.random.uniform(k_mw, (in_dim, out_dim), jnp.float32, -mbnd, mbnd)
        self.model_b = jax.random.uniform(k_mb, (1, out_dim), jnp.float32, -mbnd, mbnd)

        # --- fold the concat + conditional branch offline ---------------------
        # Flattened cat([noise, emb], dim=2) index is l*(2C)+d; split the model
        # weight rows into the noise rows and the cond rows.
        model_w3 = model_w.reshape(L, 2 * C, out_dim)
        w_noise = model_w3[:, :C, :].reshape(L * C, out_dim)   # rows hit by noise
        w_emb = model_w3[:, C:, :].reshape(L * C, out_dim)     # rows hit by cond_emb

        # Whole conditional path is linear per class -> one fused table:
        #   cond_tbl[k] = (E[k] @ W_lin + b_lin) @ W_emb + b_model
        cond_feat = self.emb_table @ self.lin_w + self.lin_b          # (n_classes, L*C)
        cond_tbl = cond_feat @ w_emb + self.model_b                   # (n_classes, out_dim)

        # Pad output columns to a lane-dense multiple of 128; pad class rows to a
        # multiple of 8 (dense 2-D layout, no singleton sublane waste).
        n_pad = _round_up(out_dim, 128)
        self.n_pad = n_pad
        self.w_noise = jnp.pad(
            w_noise, ((0, 0), (0, n_pad - out_dim))).astype(jnp.bfloat16)
        self.cond_tbl = jnp.pad(
            cond_tbl,
            ((0, self.n_classes_pad - n_classes), (0, n_pad - out_dim)),
        ).astype(jnp.float32)                                          # (ncls_pad, n_pad)

        # f32 copies for the pure-JAX reference check only.
        self._w_noise_f32 = w_noise
        self._cond_tbl_f32 = cond_tbl

        # N tile: whole head when small, otherwise a <=2048-wide 128-multiple
        # (keeps double-buffered weight/table/output tiles well inside v7x's
        # 32 MiB scoped-VMEM default; v5e/v6e could go larger).
        tn = min(n_pad, 2048)
        while n_pad % tn:
            tn -= 128
        self.tile_n = tn

    def forward(self, noise: jnp.ndarray, cond: jnp.ndarray = None,
                key: jax.Array = None) -> jnp.ndarray:
        B = noise.shape[0]
        C, L, S = self.n_channels, self.n_units_latent, self.image_size
        LC = L * C

        if cond is None:
            # torch.randperm(self.cond.size(0))[:len(noise)]
            if key is None:
                key = jax.random.PRNGKey(1)
            perm = jax.random.permutation(key, self.cond.shape[0])
            cond = self.cond[perm[:B]]

        # TODO(synk): torch.nn.Embedding raises on out-of-range class ids; here
        # ids are clamped so the in-kernel table lookup stays in bounds.
        cond_ids = jnp.clip(cond.astype(jnp.int32).reshape(B), 0, self.n_classes - 1)

        # Batch tile: multiple of 8, capped at 256 (fills the 256-wide MXU on
        # v6e/v7x; on v5e's 128-wide MXU this is simply two passes).
        TB = min(256, _round_up(B, 8))
        B_pad = _round_up(B, TB)
        noise_flat = noise.reshape(B, LC).astype(jnp.float32)
        noise_p = jnp.pad(noise_flat, ((0, B_pad - B), (0, 0))).astype(jnp.bfloat16)
        ids_p = jnp.pad(cond_ids, (0, B_pad - B)).reshape(B_pad, 1)

        N_pad, TN = self.n_pad, self.tile_n
        # Batch is the INNER (fastest) grid axis so the W_noise / cond_tbl blocks
        # stay resident across all batch tiles of a given N block.
        grid = (N_pad // TN, B_pad // TB)

        out = pl.pallas_call(
            _cond_gen_kernel,
            out_shape=jax.ShapeDtypeStruct((B_pad, N_pad), jnp.bfloat16),
            grid_spec=pltpu.PrefetchScalarGridSpec(
                num_scalar_prefetch=0,
                grid=grid,
                in_specs=[
                    pl.BlockSpec((TB, 1), lambda n, b: (b, 0)),                 # ids
                    pl.BlockSpec((TB, LC), lambda n, b: (b, 0)),                # noise
                    pl.BlockSpec((LC, TN), lambda n, b: (0, n)),                # W_noise
                    pl.BlockSpec((self.n_classes_pad, TN), lambda n, b: (0, n)),# table
                ],
                out_specs=pl.BlockSpec((TB, TN), lambda n, b: (b, n)),
            ),
            compiler_params=pltpu.CompilerParams(
                dimension_semantics=("parallel", "parallel")),
        )(ids_p, noise_p, self.w_noise, self.cond_tbl)

        # bf16 output (kernel is HBM-bound; halves the store stream).  Upcast
        # downstream if f32 is required.
        return out[:B, :self.out_dim].reshape(B, C, S, S)  # NCHW, bf16

    def reference_forward(self, noise: jnp.ndarray, cond: jnp.ndarray) -> jnp.ndarray:
        """Pure-JAX f32 reference of the same fused math (for testing)."""
        B = noise.shape[0]
        C, L, S = self.n_channels, self.n_units_latent, self.image_size
        ids = jnp.clip(cond.astype(jnp.int32).reshape(B), 0, self.n_classes - 1)
        noise_flat = noise.reshape(B, L * C).astype(jnp.float32)
        pre = noise_flat @ self._w_noise_f32 + self._cond_tbl_f32[ids]
        return jnp.tanh(pre).reshape(B, C, S, S)


if __name__ == "__main__":
    key = jax.random.PRNGKey(0)
    k_noise, k_cond, k_params = jax.random.split(key, 3)

    B, C, L, S = 2, 4, 8, 8           # batch, n_channels, n_units_latent, image spatial
    H = 32                            # cond_embedding_n_units_hidden (default 100, small here)

    cond_reference = jnp.array([0, 1, 2, 0, 1, 2, 0, 1], dtype=jnp.int32)
    gen = ConditionalGenerator(n_channels=C, n_units_latent=L,
                               cond=cond_reference,
                               cond_embedding_n_units_hidden=H,
                               image_size=S, key=k_params)

    noise = jax.random.normal(k_noise, (B, L, C, 1), jnp.float32)
    cond = jax.random.randint(k_cond, (B,), 0, 3, jnp.int32)

    out = gen.forward(noise, cond)
    jax.block_until_ready(out)

    assert out.shape == (B, C, S, S) and out.dtype == jnp.bfloat16
    out_f32 = out.astype(jnp.float32)
    assert bool(jnp.all(jnp.isfinite(out_f32)))

    # Correctness vs. pure-JAX f32 reference (bf16 operand/output tolerance).
    ref = gen.reference_forward(noise, cond)
    max_err = float(jnp.max(jnp.abs(out_f32 - ref)))
    assert max_err < 5e-2, f"max abs error {max_err}"

    print("KERNEL_OK")
</pallas_src>

<mosaic_0001>
module attributes {stable_mosaic.version = 11 : i64} {
  func.func @_cond_gen_kernel(%arg0: i32, %arg1: i32, %arg2: memref<8x1xi32, #tpu.memory_space<vmem>>, %arg3: memref<8x32xbf16, #tpu.memory_space<vmem>>, %arg4: memref<32x256xbf16, #tpu.memory_space<vmem>>, %arg5: memref<8x256xf32, #tpu.memory_space<vmem>>, %arg6: memref<8x256xbf16, #tpu.memory_space<vmem>>) attributes {dimension_semantics = [#tpu.dimension_semantics<parallel>, #tpu.dimension_semantics<parallel>], iteration_bounds = array<i64: 1, 1>, scalar_prefetch = 0 : i64, scratch_operands = 0 : i64, tpu.core_type = #tpu.core_type<tc>, window_params = [{transform_indices = @transform_0, window_bounds = array<i64: 8, 1>}, {transform_indices = @transform_1, window_bounds = array<i64: 8, 32>}, {transform_indices = @transform_2, window_bounds = array<i64: 32, 256>}, {transform_indices = @transform_3, window_bounds = array<i64: 8, 256>}, {transform_indices = @transform_4, window_bounds = array<i64: 8, 256>}]} {
    %c0 = arith.constant 0 : index
    %c0_0 = arith.constant 0 : index
    %0 = vector.load %arg3[%c0, %c0_0] : memref<8x32xbf16, #tpu.memory_space<vmem>>, vector<8x32xbf16>
    %c0_1 = arith.constant 0 : index
    %c0_2 = arith.constant 0 : index
    %1 = vector.load %arg4[%c0_1, %c0_2] : memref<32x256xbf16, #tpu.memory_space<vmem>>, vector<32x256xbf16>
    %cst = arith.constant dense<0.000000e+00> : vector<8x256xf32>
    %2 = tpu.matmul %0, %1, %cst {dimension_numbers = #tpu.dot_dimension_numbers<[1], [0], [0], [1], [0, 0, 1, 1], [], []>} : vector<8x32xbf16>, vector<32x256xbf16>, vector<8x256xf32> -> vector<8x256xf32>
    %c0_3 = arith.constant 0 : index
    %c0_4 = arith.constant 0 : index
    %3 = vector.load %arg2[%c0_3, %c0_4] : memref<8x1xi32, #tpu.memory_space<vmem>>, vector<8x1xi32>
    %4 = tpu.iota {dimensions = array<i32: 1>} : vector<8x8xi32>
    %5 = vector.broadcast %3 : vector<8x1xi32> to vector<8x8xi32>
    %6 = arith.cmpi eq, %5, %4 : vector<8x8xi32>
    %7 = arith.extui %6 : vector<8x8xi1> to vector<8x8xi32>
    %8 = arith.sitofp %7 : vector<8x8xi32> to vector<8x8xf32>
    %c0_5 = arith.constant 0 : index
    %c0_6 = arith.constant 0 : index
    %9 = vector.load %arg5[%c0_5, %c0_6] : memref<8x256xf32, #tpu.memory_space<vmem>>, vector<8x256xf32>
    %cst_7 = arith.constant dense<0.000000e+00> : vector<8x256xf32>
    %10 = tpu.matmul %8, %9, %cst_7 {dimension_numbers = #tpu.dot_dimension_numbers<[1], [0], [0], [1], [0, 0, 1, 1], [], []>} : vector<8x8xf32>, vector<8x256xf32>, vector<8x256xf32> -> vector<8x256xf32>
    %11 = arith.addf %2, %10 : vector<8x256xf32>
    %12 = math.tanh %11 : vector<8x256xf32>
    %13 = arith.truncf %12 : vector<8x256xf32> to vector<8x256xbf16>
    %c0_8 = arith.constant 0 : index
    %c0_9 = arith.constant 0 : index
    %14 = vector.load %arg6[%c0_8, %c0_9] : memref<8x256xbf16, #tpu.memory_space<vmem>>, vector<8x256xbf16>
    tpu.vector_store %arg6[%c0_8, %c0_9], %13 {strides = array<i32>} : memref<8x256xbf16, #tpu.memory_space<vmem>>, vector<8x256xbf16>,
    return
  }
  func.func @transform_0(%arg0: i32, %arg1: i32) -> (i32, i32) {
    %c0_i32 = arith.constant 0 : i32
    %c0_i32_0 = arith.constant 0 : i32
    return %arg1, %c0_i32 : i32, i32
  }
  func.func @transform_1(%arg0: i32, %arg1: i32) -> (i32, i32) {
    %c0_i32 = arith.constant 0 : i32
    %c0_i32_0 = arith.constant 0 : i32
    return %arg1, %c0_i32 : i32, i32
  }
  func.func @transform_2(%arg0: i32, %arg1: i32) -> (i32, i32) {
    %c0_i32 = arith.constant 0 : i32
    %c0_i32_0 = arith.constant 0 : i32
    return %c0_i32, %arg0 : i32, i32
  }
  func.func @transform_3(%arg0: i32, %arg1: i32) -> (i32, i32) {
    %c0_i32 = arith.constant 0 : i32
    %c0_i32_0 = arith.constant 0 : i32
    return %c0_i32, %arg0 : i32, i32
  }
  func.func @transform_4(%arg0: i32, %arg1: i32) -> (i32, i32) {
    %c0_i32 = arith.constant 0 : i32
    return %arg1, %arg0 : i32, i32
  }
}

</mosaic_0001>

<llo_original>
// kernel: tpu_custom_call.1
$region0: #{tpu_custom_call.1}
  #allocation0 [shape = 'u32[]', space=smem, size = 0x4, offset = 0x4, fixed_abs, tag = 'smem constant byte address 0x4 - core index']
  #allocation1 [shape = 'u32[144,128]{1,0:T(1,128)}', space=vmem, size = 0x12000, scoped, tag = 'internal scratch']
  %s0 = inlined_call_operand.vmem [shape: s32[8,1], index: 0, kind: input, shape index: {}]
  %s1 = inlined_call_operand.vmem [shape: bf16[8,32], index: 1, kind: input, shape index: {}]
  %s2 = inlined_call_operand.hbm [shape: bf16[32,256], index: 2, kind: input, shape index: {}]
  %s3 = inlined_call_operand.vmem [shape: f32[8,256], index: 3, kind: input, shape index: {}]
  %s4 = inlined_call_operand.hbm [shape: bf16[8,256], index: 4, kind: output, shape index: {}]
  %s5 = sld [smem:[#allocation0]]
  $region30: #{tpu_custom_call.1} parent=0
    _
  %s7 = ssub.s32 1, %s5
  %s8 = scalar_select 0, %s7, %s5
  $region1: #{tpu_custom_call.1} parent=0
    #allocation2 [shape = 'u8[16384]{0}', space=vmem, size = 0x4000, scoped, tag = 'input window, operand 2, single buffered']
    #allocation3 [shape = 's32[1]{0}', space=sflag, size = 0x4, scoped, tag = 'scoped memory for tpu_custom_call.1']
    #allocation4 [shape = 's32[1]{0}', space=sflag, size = 0x4, scoped, tag = 'scoped memory for tpu_custom_call.1']
    #allocation5 [shape = 'u8[4096]{0}', space=vmem, size = 0x1000, scoped, tag = 'output window, operand 0, single buffered']
    %9 = vsyncpa [#allocation3], 0
    %10 = vsyncpa [#allocation4], 0
    // Predicated region
    $region2: #{tpu_custom_call.1} parent=1 // pred_check
      _
    $region3: #{tpu_custom_call.1} parent=1 // pred_check_branch
      %12 = sbr.rel (0) target = $region5
    $region4: #{tpu_custom_call.1} parent=1 // pred_region
      _
    $region5: #{tpu_custom_call.1} parent=1 // pred_fallthru
      _
    // Predicated region
    $region6: #{tpu_custom_call.1} parent=1 // pred_check
      _
    $region7: #{tpu_custom_call.1} parent=1 // pred_check_branch
      %14 = sbr.rel (0) target = $region9
    $region8: #{tpu_custom_call.1} parent=1 // pred_region
      _
    $region9: #{tpu_custom_call.1} parent=1 // pred_fallthru
      _
    // Predicated region
    $region10: #{tpu_custom_call.1} parent=1 // pred_check
      _
    $region11: #{tpu_custom_call.1} parent=1 // pred_check_branch
      %16 = sbr.rel (0) target = $region13
    $region12: #{tpu_custom_call.1} parent=1 // pred_region
      %s18 = ssub.s32 512, 512
      %19 = vsyncadd [#allocation3], %s18
      %s20 = sshll.u32 [#allocation2], 4
      %s21 = int_to_ptr.vmem [resolvable:$true] %s20
      %26 = dma.hbm_to_vmem [thread:$0]  %s2, 512, %s21, [#allocation3], 128, 128, 8
    $region13: #{tpu_custom_call.1} parent=1 // pred_fallthru
      _
    // Predicated region
    $region14: #{tpu_custom_call.1} parent=1 // pred_check
      _
    $region15: #{tpu_custom_call.1} parent=1 // pred_check_branch
      %28 = sbr.rel (0) target = $region17
    $region16: #{tpu_custom_call.1} parent=1 // pred_region
      _
    $region17: #{tpu_custom_call.1} parent=1 // pred_fallthru
      _
    // Predicated region
    $region18: #{tpu_custom_call.1} parent=1 // pred_check
      _
    $region19: #{tpu_custom_call.1} parent=1 // pred_check_branch
      %30 = sbr.rel (0) target = $region21
    $region20: #{tpu_custom_call.1} parent=1 // pred_region
      %31 = dma.done [#allocation3], 512
    $region21: #{tpu_custom_call.1} parent=1 // pred_fallthru
      _
    %v33 = vld [vmem:[%s1] sm:$0xf]
    %v34 = vld [vmem:[#allocation2] sm:$0xff]
    %v35 = vld [vmem:[#allocation2 + $0x8] sm:$0xff]
    %v36 = vld [vmem:[#allocation2 + $0x10] sm:$0xff]
    %v37 = vld [vmem:[#allocation2 + $0x18] sm:$0xff]
    %v38 = vld [vmem:[%s0] sm:$0xff]
    %v39 = vlaneseq
    %v40 = vand.u32 %v39, 127
    %41 = vset.pattern.permute.xlu0 0
    %42 = vperm.xlu0 %41, %v38
    %v43 = vpop.permute.xlu0 %42
    %vm44 = vcmp.eq.s32.totalorder %v43, %v40
    %v45 = vsel %vm44, 1, 0
    %v46 = vcvt.s32.f32 %v45
    %v47 = vld [vmem:[%s3] sm:$0xff]
    %v48 = vld [vmem:[%s3 + $0x8] sm:$0xff]
    %vm49 = vcmask 64512
    %v51 = vsel %vm49, %v46, 0
    %53 = vmatprep.subr.mxu0 %v48
    %54 = vmatpush1.msra.mxu0 %v47
    %55 = vmatprep.subr.mxu0 0.0
    %56 = vmatpush1.msra.mxu0 0.0
    %57 = vmatprep.subr.mxu0 0.0
    %58 = vmatpush1.msra.mxu0 0.0
    %59 = vmatprep.subr.mxu0 0.0
    %60 = vmatpush1.msra.mxu0 0.0
    %61 = vmatprep.subr.mxu0 0.0
    %62 = vmatpush1.msra.mxu0 0.0
    %63 = vmatprep.subr.mxu0 0.0
    %64 = vmatpush1.msra.mxu0 0.0
    %65 = vmatprep.subr.mxu0 0.0
    %66 = vmatpush1.msra.mxu0 0.0
    %67 = vmatprep.subr.mxu0 0.0
    %68 = vmatpush1.msra.mxu0 0.0
    %69 = vmatprep.subr.mxu0 0.0
    %70 = vmatpush1.msra.mxu0 0.0
    %71 = vmatprep.subr.mxu0 0.0
    %72 = vmatpush1.msra.mxu0 0.0
    %73 = vmatprep.subr.mxu0 0.0
    %74 = vmatpush1.msra.mxu0 0.0
    %75 = vmatprep.subr.mxu0 0.0
    %76 = vmatpush1.msra.mxu0 0.0
    %77 = vmatprep.subr.mxu0 0.0
    %78 = vmatpush1.msra.mxu0 0.0
    %79 = vmatprep.subr.mxu0 0.0
    %80 = vmatpush1.msra.mxu0 0.0
    %81 = vmatprep.subr.mxu0 0.0
    %82 = vmatpush1.msra.mxu0 0.0
    %83 = vmatprep.subr.mxu0 0.0
    %84 = vmatpush1.msra.mxu0 0.0
    %85 = vmatprep.subr.mxu0 0.0
    %86 = vmatpush1.msra.mxu0 0.0
    %87 = vmatprep.subr.mxu0 0.0
    %88 = vmatpush1.msra.mxu0 0.0
    %89 = vmatprep.subr.mxu0 0.0
    %90 = vmatpush1.msra.mxu0 0.0
    %91 = vmatprep.subr.mxu0 0.0
    %92 = vmatpush1.msra.mxu0 0.0
    %93 = vmatprep.subr.mxu0 0.0
    %94 = vmatpush1.msra.mxu0 0.0
    %95 = vmatprep.subr.mxu0 0.0
    %96 = vmatpush1.msra.mxu0 0.0
    %97 = vmatprep.subr.mxu0 0.0
    %98 = vmatpush1.msra.mxu0 0.0
    %99 = vmatprep.subr.mxu0 0.0
    %100 = vmatpush1.msra.mxu0 0.0
    %101 = vmatprep.subr.mxu0 0.0
    %102 = vmatpush1.msra.mxu0 0.0
    %103 = vmatprep.subr.mxu0 0.0
    %104 = vmatpush1.msra.mxu0 0.0
    %105 = vmatprep.subr.mxu0 0.0
    %106 = vmatpush1.msra.mxu0 0.0
    %107 = vmatprep.subr.mxu0 0.0
    %108 = vmatpush1.msra.mxu0 0.0
    %109 = vmatprep.subr.mxu0 0.0
    %110 = vmatpush1.msra.mxu0 0.0
    %111 = vmatprep.subr.mxu0 0.0
    %112 = vmatpush1.msra.mxu0 0.0
    %113 = vmatprep.subr.mxu0 0.0
    %114 = vmatpush1.msra.mxu0 0.0
    %115 = vmatprep.subr.mxu0 0.0
    %116 = vmatpush1.msra.mxu0 0.0
    %117 = vmatprep.mubr.f32.mxu0 0.0
    %118 = vmatmul.mubr.f32.gmra.mrb[0].mxu0 %v51
    %v119 = vpop.f32.mrb[0].mxu0
    %v120 = vadd.f32 0.0, %v119
    %v121 = vpop.f32.mrb[0].mxu0
    %v122 = vadd.f32 0.0, %v121
    %123 = vdwg.mxu0
    %v128 = vunpack.c.l.b16 %v34
    %v129 = vunpack.c.h.b16 %v34
    %v130 = vunpack.c.l.b16 %v35
    %v131 = vunpack.c.h.b16 %v35
    %v132 = vunpack.c.l.b16 %v36
    %v133 = vunpack.c.h.b16 %v36
    %v134 = vunpack.c.l.b16 %v37
    %v135 = vunpack.c.h.b16 %v37
    %v136 = vpack.c.b16 %v130, %v128
    %v137 = vpack.c.b16 %v131, %v129
    %v138 = vpack.c.b16 %v134, %v132
    %v139 = vpack.c.b16 %v135, %v133
    %vm144 = vcmask 261120
    %v146 = vsel %vm144, %v33, 0
    %148 = vmatprep.subr.bf16.mxu0 %v137
    %149 = vmatpush1.bf16.msra.mxu0 %v136
    %150 = vmatprep.subr.bf16.mxu0 %v139
    %151 = vmatpush1.bf16.msra.mxu0 %v138
    %152 = vmatprep.subr.bf16.mxu0 0
    %153 = vmatpush1.bf16.msra.mxu0 0
    %154 = vmatprep.subr.bf16.mxu0 0
    %155 = vmatpush1.bf16.msra.mxu0 0
    %156 = vmatprep.subr.bf16.mxu0 0
    %157 = vmatpush1.bf16.msra.mxu0 0
    %158 = vmatprep.subr.bf16.mxu0 0
    %159 = vmatpush1.bf16.msra.mxu0 0
    %160 = vmatprep.subr.bf16.mxu0 0
    %161 = vmatpush1.bf16.msra.mxu0 0
    %162 = vmatprep.subr.bf16.mxu0 0
    %163 = vmatpush1.bf16.msra.mxu0 0
    %164 = vmatprep.subr.bf16.mxu0 0
    %165 = vmatpush1.bf16.msra.mxu0 0
    %166 = vmatprep.subr.bf16.mxu0 0
    %167 = vmatpush1.bf16.msra.mxu0 0
    %168 = vmatprep.subr.bf16.mxu0 0
    %169 = vmatpush1.bf16.msra.mxu0 0
    %170 = vmatprep.subr.bf16.mxu0 0
    %171 = vmatpush1.bf16.msra.mxu0 0
    %172 = vmatprep.subr.bf16.mxu0 0
    %173 = vmatpush1.bf16.msra.mxu0 0
    %174 = vmatprep.subr.bf16.mxu0 0
    %175 = vmatpush1.bf16.msra.mxu0 0
    %176 = vmatprep.subr.bf16.mxu0 0
    %177 = vmatpush1.bf16.msra.mxu0 0
    %178 = vmatprep.subr.bf16.mxu0 0
    %179 = vmatpush1.bf16.msra.mxu0 0
    %180 = vmatprep.mubr.bf16.mxu0 0
    %181 = vmatmul.mubr.bf16.gmra.mrb[0].mxu0 %v146
    %v182 = vpop.f32.mrb[0].mxu0
    %v183 = vadd.f32 %v120, %v182
    %v184 = vpop.f32.mrb[0].mxu0
    %v185 = vadd.f32 %v122, %v184
    %v186 = vpop.f32.mrb[0].mxu0
    %v187 = vpop.f32.mrb[0].mxu0
    %188 = vdwg.mxu0
    %v189 = vtanh.pop %v183
    %v190 = vtanh.pop %v185
    %v191 = vpack.c.bf16 %v189, %v189
    %v192 = vpack.c.bf16 %v190, %v190
    %v195 = vunpack.c.l.b16 %v191
    %v196 = vunpack.c.l.b16 %v192
    %v197 = vpack.c.b16 %v196, %v195
    %199 = vst [vmem:[#allocation5] sm:$0xff] %v197
    // Predicated region
    $region22: #{tpu_custom_call.1} parent=1 // pred_check
      _
    $region23: #{tpu_custom_call.1} parent=1 // pred_check_branch
      %201 = sbr.rel (0) target = $region25
    $region24: #{tpu_custom_call.1} parent=1 // pred_region
      %s203 = ssub.s32 128, 128
      %204 = vsyncadd [#allocation4], %s203
      %s206 = sshll.u32 [#allocation5], 4
      %s207 = int_to_ptr.vmem [resolvable:$true] %s206
      %209 = dma.vmem_to_hbm [thread:$0]  %s207, 128, %s4, [#allocation4]
    $region25: #{tpu_custom_call.1} parent=1 // pred_fallthru
      _
    // Predicated region
    $region26: #{tpu_custom_call.1} parent=1 // pred_check
      _
    $region27: #{tpu_custom_call.1} parent=1 // pred_check_branch
      %211 = sbr.rel (0) target = $region29
    $region28: #{tpu_custom_call.1} parent=1 // pred_region
      %212 = dma.done [#allocation4], 128
    $region29: #{tpu_custom_call.1} parent=1 // pred_fallthru
      _
    %213 = vsyncpa [#allocation3], 1
    %214 = vsyncpa [#allocation4], 1

</llo_original>
